<compile_context>
chip_gen: v5e
topology: v5e:2x2
jax: 0.10.0
libtpu: 0.0.40
codegen_flags: <defaults>
</compile_context>

<pallas_src>
import math

import jax
import jax.numpy as jnp
from jax.experimental import pallas as pl
from jax.experimental.pallas import tpu as pltpu


def _build_pe(d_model: int, max_seq_length: int) -> jnp.ndarray:
    """Replicates the PyTorch buffer construction.

    The reference module deliberately uses float16 for `position` / `div_term` /
    the sin-cos arguments and stores the result into a float32 buffer; this is
    matched here (float16 intermediates, float32 storage).  d_model must be even,
    exactly as required by the reference's pe[:, 1::2] assignment.
    """
    assert d_model % 2 == 0, "PositionalEncoding requires an even d_model"
    position = jnp.arange(0, max_seq_length, dtype=jnp.float16)[:, None]        # (L, 1)
    div_term = jnp.exp(
        jnp.arange(0, d_model, 2, dtype=jnp.float16) * (-(math.log(10000.0) / d_model))
    )                                                                            # (D/2,)
    angles = (position * div_term).astype(jnp.float16)                           # (L, D/2)
    pe = jnp.zeros((max_seq_length, d_model), dtype=jnp.float32)
    pe = pe.at[:, 0::2].set(jnp.sin(angles).astype(jnp.float32))
    pe = pe.at[:, 1::2].set(jnp.cos(angles).astype(jnp.float32))
    return pe[None, :, :]                                                        # (1, L, D)


def _add_pe_kernel(x_ref, pe_ref, o_ref):
    # x_ref / pe_ref / o_ref: (1, TR, L) sublane-dense, lane-dense tiles.
    # Pure VPU elementwise add; kernel is HBM-bandwidth bound.
    o_ref[...] = x_ref[...] + pe_ref[...]


def _round_up(n: int, m: int) -> int:
    return -(-n // m) * m


def _plan_tiles(flat: int, batch: int, itemsize: int,
                lanes: int = 512,
                target_block_bytes: int = 5 * 1024 * 1024):
    """Pick (rows_padded, row_tile, n_row_tiles) for the (B, R, L) layout.

    Row tile is a multiple of the dtype's sublane tile, sized to ~target_block_bytes
    per x/out block, with padding minimized by first fixing the number of tiles.
    """
    sub = 8 * max(1, 4 // itemsize)                  # 8 (f32) / 16 (bf16) / 32 (i8)
    r_min = -(-flat // lanes)                        # rows needed to cover `flat`
    tr_target = max(sub, (target_block_bytes // (lanes * itemsize)) // sub * sub)

    n_tiles = max(1, -(-r_min // tr_target))
    # v7x megacore: with batch == 1 make sure the single parallel row-tile axis has
    # at least 2 steps when there is enough data to split.
    if batch == 1 and n_tiles == 1 and r_min > sub:
        n_tiles = 2
    tr = _round_up(-(-r_min // n_tiles), sub)
    r_pad = n_tiles * tr
    return r_pad, tr, n_tiles


def positional_encoding_forward(x: jnp.ndarray, pe: jnp.ndarray) -> jnp.ndarray:
    """x: (B, S, D); pe: (1, max_seq_length, D). Returns x + pe[:, :S]."""
    B, S, D = x.shape
    F = S * D
    itemsize = jnp.dtype(x.dtype).itemsize
    LANES = 512

    r_pad, tr, n_tiles = _plan_tiles(F, B, itemsize, lanes=LANES)
    f_pad = r_pad * LANES

    # Layout plumbing (wrapper side): flatten, pad to the tile, reshape to a
    # sublane/lane-dense (B, R, L) slab.  Reshapes of contiguous data are free;
    # the pad (when needed) is a negligible extra DMA.
    x_flat = x.reshape(B, F)
    pe_flat = pe[:, :S, :].reshape(1, F).astype(x.dtype)
    if f_pad != F:
        x_flat = jnp.pad(x_flat, ((0, 0), (0, f_pad - F)))
        pe_flat = jnp.pad(pe_flat, ((0, 0), (0, f_pad - F)))
    x3 = x_flat.reshape(B, r_pad, LANES)
    pe3 = pe_flat.reshape(1, r_pad, LANES)

    # Pad-aware VMEM accounting: blocks are dense (no hidden sublane padding).
    block_bytes = tr * LANES * itemsize
    live_bytes = 2 * 3 * block_bytes                 # double-buffered x + pe + out
    vmem_limit = int(min(max(live_bytes + 2 * 1024 * 1024, 4 * 1024 * 1024),
                         48 * 1024 * 1024))

    out3 = pl.pallas_call(
        _add_pe_kernel,
        out_shape=jax.ShapeDtypeStruct((B, r_pad, LANES), x.dtype),
        grid_spec=pltpu.PrefetchScalarGridSpec(
            num_scalar_prefetch=0,
            # Batch innermost: pe's block index is unchanged across consecutive
            # inner steps, so its DMA is issued once per row tile, not per batch.
            grid=(n_tiles, B),
            in_specs=[
                pl.BlockSpec((1, tr, LANES), lambda t, b: (b, t, 0)),   # x
                pl.BlockSpec((1, tr, LANES), lambda t, b: (0, t, 0)),   # pe (broadcast)
            ],
            out_specs=pl.BlockSpec((1, tr, LANES), lambda t, b: (b, t, 0)),
        ),
        compiler_params=pltpu.CompilerParams(
            dimension_semantics=("parallel", "parallel"),   # pure elementwise op
            vmem_limit_bytes=vmem_limit,
        ),
    )(x3, pe3)

    return out3.reshape(B, f_pad)[:, :F].reshape(B, S, D)


if __name__ == "__main__":
    # Small shapes consistent with the module: d_model=32, max_seq_length=16,
    # input sequence length 8, batch 2.
    d_model = 32
    max_seq_length = 16
    batch = 2
    seq = 8

    pe = _build_pe(d_model, max_seq_length)

    key = jax.random.PRNGKey(0)
    x = jax.random.normal(key, (batch, seq, d_model), dtype=jnp.float32)

    # Plain-JAX reference.
    ref = x + pe[:, :seq, :]

    out = positional_encoding_forward(x, pe)
    out = jax.block_until_ready(out)

    assert out.shape == (batch, seq, d_model)
    assert jnp.allclose(out, ref, atol=1e-6), "mismatch vs reference"

    print("KERNEL_OK")
</pallas_src>

<mosaic_0001>
module attributes {stable_mosaic.version = 11 : i64} {
  func.func @_add_pe_kernel(%arg0: i32, %arg1: i32, %arg2: memref<1x8x512xf32, #tpu.memory_space<vmem>>, %arg3: memref<1x8x512xf32, #tpu.memory_space<vmem>>, %arg4: memref<1x8x512xf32, #tpu.memory_space<vmem>>) attributes {dimension_semantics = [#tpu.dimension_semantics<parallel>, #tpu.dimension_semantics<parallel>], iteration_bounds = array<i64: 1, 2>, scalar_prefetch = 0 : i64, scratch_operands = 0 : i64, tpu.core_type = #tpu.core_type<tc>, window_params = [{transform_indices = @transform_0, window_bounds = array<i64: 1, 8, 512>}, {transform_indices = @transform_1, window_bounds = array<i64: 1, 8, 512>}, {transform_indices = @transform_2, window_bounds = array<i64: 1, 8, 512>}]} {
    %c0 = arith.constant 0 : index
    %c0_0 = arith.constant 0 : index
    %c0_1 = arith.constant 0 : index
    %0 = vector.load %arg2[%c0, %c0_0, %c0_1] : memref<1x8x512xf32, #tpu.memory_space<vmem>>, vector<1x8x512xf32>
    %c0_2 = arith.constant 0 : index
    %c0_3 = arith.constant 0 : index
    %c0_4 = arith.constant 0 : index
    %1 = vector.load %arg3[%c0_2, %c0_3, %c0_4] : memref<1x8x512xf32, #tpu.memory_space<vmem>>, vector<1x8x512xf32>
    %2 = arith.addf %0, %1 : vector<1x8x512xf32>
    %c0_5 = arith.constant 0 : index
    %c0_6 = arith.constant 0 : index
    %c0_7 = arith.constant 0 : index
    %3 = vector.load %arg4[%c0_5, %c0_6, %c0_7] : memref<1x8x512xf32, #tpu.memory_space<vmem>>, vector<1x8x512xf32>
    tpu.vector_store %arg4[%c0_5, %c0_6, %c0_7], %2 {strides = array<i32>} : memref<1x8x512xf32, #tpu.memory_space<vmem>>, vector<1x8x512xf32>,
    return
  }
  func.func @transform_0(%arg0: i32, %arg1: i32) -> (i32, i32, i32) {
    %c0_i32 = arith.constant 0 : i32
    %c0_i32_0 = arith.constant 0 : i32
    return %arg1, %arg0, %c0_i32 : i32, i32, i32
  }
  func.func @transform_1(%arg0: i32, %arg1: i32) -> (i32, i32, i32) {
    %c0_i32 = arith.constant 0 : i32
    %c0_i32_0 = arith.constant 0 : i32
    %c0_i32_1 = arith.constant 0 : i32
    return %c0_i32, %arg0, %c0_i32_0 : i32, i32, i32
  }
  func.func @transform_2(%arg0: i32, %arg1: i32) -> (i32, i32, i32) {
    %c0_i32 = arith.constant 0 : i32
    %c0_i32_0 = arith.constant 0 : i32
    return %arg1, %arg0, %c0_i32 : i32, i32, i32
  }
}

</mosaic_0001>

<llo_original>
// kernel: tpu_custom_call.1
$region0: #{tpu_custom_call.1}
  #allocation0 [shape = 'u32[]', space=smem, size = 0x4, offset = 0x4, fixed_abs, tag = 'smem constant byte address 0x4 - core index']
  #allocation1 [shape = 'u32[72,128]{1,0:T(1,128)}', space=vmem, size = 0x9000, scoped, tag = 'internal scratch']
  %s0 = inlined_call_operand.hbm [shape: f32[2,8,512], index: 0, kind: input, shape index: {}]
  %s1 = inlined_call_operand.hbm [shape: f32[1,8,512], index: 1, kind: input, shape index: {}]
  %s2 = inlined_call_operand.hbm [shape: f32[2,8,512], index: 2, kind: output, shape index: {}]
  %s3 = sld [smem:[#allocation0]]
  $region49: #{tpu_custom_call.1} parent=0
    _
  %s5 = ssub.s32 1, %s3
  %s6 = scalar_select 0, %s5, %s3
  $region1: #{tpu_custom_call.1} parent=0
    #allocation2 [shape = 'u8[32768]{0}', space=vmem, size = 0x8000, scoped, tag = 'input window, operand 0']
    #allocation3 [shape = 's32[2]{0}', space=sflag, size = 0x8, scoped, tag = 'scoped memory for tpu_custom_call.1']
    #allocation4 [shape = 's32[2]{0}', space=sflag, size = 0x8, scoped, tag = 'scoped memory for tpu_custom_call.1']
    #allocation5 [shape = 'u8[16384]{0}', space=vmem, size = 0x4000, scoped, tag = 'input window, operand 1, single buffered']
    #allocation6 [shape = 's32[1]{0}', space=sflag, size = 0x4, scoped, tag = 'scoped memory for tpu_custom_call.1']
    #allocation7 [shape = 'u8[32768]{0}', space=vmem, size = 0x8000, scoped, tag = 'output window, operand 0']
    %7 = vsyncpa [#allocation3], 0
    %s8 = scalar_lea.sflag [#allocation3], 1
    %9 = vsyncpa %s8, 0
    %10 = vsyncpa [#allocation6], 0
    %11 = vsyncpa [#allocation4], 0
    %s12 = scalar_lea.sflag [#allocation4], 1
    %13 = vsyncpa %s12, 0
    loop: start=0, step=1, limit=4
    $region2: #{tpu_custom_call.1} parent=1 // loop_pre_header
      _
    $region3: #{tpu_custom_call.1} parent=1 // loop_header
      %s15 = sphi 0, %s19
      %p16 = scmp.ge.s32.totalorder %s15, 4
      %s22 = sphi 0, %s34
      %s23 = sphi 0, %s30
      %s24 = sphi 0, %s22
      %s25 = sphi 0, %s23
      %s26 = sphi 0, %s24
      %s27 = sphi 0, %s25
      %s39 = sphi 0, %s41
      %s42 = sphi 0, %s39
      %s43 = sphi 0, %s42
      %s59 = sphi 0, %s43
      %s65 = sphi 0, %s67
      %s68 = sphi 0, %s65
      %s69 = sphi 0, %s68
      %s85 = sphi 0, %s69
      %s93 = sphi 0, %s95
      %s96 = sphi 0, %s93
      %s97 = sphi 0, %s96
      %s113 = sphi 0, %s97
    $region4: #{tpu_custom_call.1} parent=1 // loop_header_branch
      %18 = sbr.rel (%p16) target = $region8
    $region5: #{tpu_custom_call.1} parent=1 // loop_body
      %s20 = ssub.s32 %s15, 1
      %s21 = ssub.s32 %s15, 2
      %s28 = sadd.s32 1, %s23
      %p29 = scmp.ge.s32.totalorder %s28, 2
      %s30 = scalar_select %p29, 0, %s28
      %s31 = sadd.s32 1, %s22
      %s32 = scalar_select %p29, %s31, %s22
      %p33 = scmp.ge.s32.totalorder %s32, 1
      %s34 = scalar_select %p33, 0, %s32
      %s35 = ssub.s32 %s23, %s30
      %s36 = ssub.s32 %s22, %s34
      %s37 = sor.u32 %s35, %s36
      %p38 = scmp.eq.s32.totalorder %s37, 0
      %s40 = sadd.s32 %s39, 1
      %s41 = scalar_select %p38, %s39, %s40
      %p44 = pneg %p38
      %p45 = scmp.eq.s32.totalorder %s15, 1
      %p46 = por %p44, %p45
      %p47 = scmp.ne.s32.totalorder %s39, %s42
      %p48 = scmp.eq.s32.totalorder %s15, 0
      %p49 = por %p47, %p48
      %p50 = scmp.ne.s32.totalorder %s39, %s42
      %p51 = scmp.eq.s32.totalorder %s20, 1
      %p52 = por %p50, %p51
      %p53 = scmp.ne.s32.totalorder %s42, %s43
      %p54 = scmp.eq.s32.totalorder %s20, 0
      %p55 = por %p53, %p54
      %p56 = scmp.ne.s32.totalorder %s42, %s43
      %p57 = scmp.eq.s32.totalorder %s21, 1
      %p58 = por %p56, %p57
      %p60 = scmp.ne.s32.totalorder %s43, %s59
      %p61 = scmp.eq.s32.totalorder %s21, 0
      %p62 = por %p60, %p61
      %s63 = ssub.s32 %s22, %s34
      %p64 = scmp.eq.s32.totalorder %s63, 0
      %s66 = sadd.s32 %s65, 1
      %s67 = scalar_select %p64, %s65, %s66
      %p70 = pneg %p64
      %p71 = scmp.eq.s32.totalorder %s15, 1
      %p72 = por %p70, %p71
      %p73 = scmp.ne.s32.totalorder %s65, %s68
      %p74 = scmp.eq.s32.totalorder %s15, 0
      %p75 = por %p73, %p74
      %p76 = scmp.ne.s32.totalorder %s65, %s68
      %p77 = scmp.eq.s32.totalorder %s20, 1
      %p78 = por %p76, %p77
      %p79 = scmp.ne.s32.totalorder %s68, %s69
      %p80 = scmp.eq.s32.totalorder %s20, 0
      %p81 = por %p79, %p80
      %p82 = scmp.ne.s32.totalorder %s68, %s69
      %p83 = scmp.eq.s32.totalorder %s21, 1
      %p84 = por %p82, %p83
      %p86 = scmp.ne.s32.totalorder %s69, %s85
      %p87 = scmp.eq.s32.totalorder %s21, 0
      %p88 = por %p86, %p87
      %s89 = ssub.s32 %s23, %s30
      %s90 = ssub.s32 %s22, %s34
      %s91 = sor.u32 %s89, %s90
      %p92 = scmp.eq.s32.totalorder %s91, 0
      %s94 = sadd.s32 %s93, 1
      %s95 = scalar_select %p92, %s93, %s94
      %p98 = pneg %p92
      %p99 = scmp.eq.s32.totalorder %s15, 1
      %p100 = por %p98, %p99
      %p101 = scmp.ne.s32.totalorder %s93, %s96
      %p102 = scmp.eq.s32.totalorder %s15, 0
      %p103 = por %p101, %p102
      %p104 = scmp.ne.s32.totalorder %s93, %s96
      %p105 = scmp.eq.s32.totalorder %s20, 1
      %p106 = por %p104, %p105
      %p107 = scmp.ne.s32.totalorder %s96, %s97
      %p108 = scmp.eq.s32.totalorder %s20, 0
      %p109 = por %p107, %p108
      %p110 = scmp.ne.s32.totalorder %s96, %s97
      %p111 = scmp.eq.s32.totalorder %s21, 1
      %p112 = por %p110, %p111
      %p114 = scmp.ne.s32.totalorder %s97, %s113
      %p115 = scmp.eq.s32.totalorder %s21, 0
      %p116 = por %p114, %p115
      %p117 = scmp.le.s32.totalorder 1, %s15
      %p118 = scmp.lt.s32.totalorder %s15, 3
      %p119 = pnand %p117, %p118
      %p120 = pneg %p119
      // Predicated region
      $region9: #{tpu_custom_call.1} parent=5 // pred_check
        _
      $region10: #{tpu_custom_call.1} parent=5 // pred_check_branch
        %122 = sbr.rel (%p119) target = $region12
      $region11: #{tpu_custom_call.1} parent=5 // pred_region
        %s123 = ssub.s32 %s15, 1
        // Predicated region
        $region13: #{tpu_custom_call.1} parent=11 // pred_check
          %p124 = pneg %p81
        $region14: #{tpu_custom_call.1} parent=11 // pred_check_branch
          %126 = sbr.rel (%p124) target = $region16
        $region15: #{tpu_custom_call.1} parent=11 // pred_region
          %128 = vsyncadd [#allocation6], 0
          %s129 = smul.addr %s24, 4
          %s130 = smul.addr %s129, 8
          %s131 = scalar_lea.hbm %s1, %s130
          %s133 = sshll.u32 %s131, 4
          %s134 = int_to_ptr.hbm [resolvable:$true] %s133
          %s135 = sshll.u32 [#allocation5], 4
          %s136 = int_to_ptr.vmem [resolvable:$true] %s135
          %138 = dma.hbm_to_vmem [thread:$0]  %s134, 512, %s136, [#allocation6]
        $region16: #{tpu_custom_call.1} parent=11 // pred_fallthru
          _
      $region12: #{tpu_custom_call.1} parent=5 // pred_fallthru
        _
      %p139 = scmp.lt.s32.totalorder %s15, 2
      // Predicated region
      $region17: #{tpu_custom_call.1} parent=5 // pred_check
        %p140 = pneg %p139
      $region18: #{tpu_custom_call.1} parent=5 // pred_check_branch
        %142 = sbr.rel (%p140) target = $region20
      $region19: #{tpu_custom_call.1} parent=5 // pred_region
        // Predicated region
        $region21: #{tpu_custom_call.1} parent=19 // pred_check
          %p143 = pneg %p49
        $region22: #{tpu_custom_call.1} parent=19 // pred_check_branch
          %145 = sbr.rel (%p143) target = $region24
        $region23: #{tpu_custom_call.1} parent=19 // pred_region
          %s146 = sand.u32 %s39, 1
          %s147 = scalar_lea.sflag [#allocation3], %s146
          %s148 = sand.u32 %s39, 1
          %s149 = smul.addr %s148, 32
          %s150 = scalar_lea.vmem [#allocation2], %s149
          %152 = vsyncadd %s147, 0
          %s153 = smul.addr %s22, 4
          %s154 = smul.addr %s23, 4
          %s155 = sadd.s32 %s153, %s154
          %s156 = smul.addr %s155, 8
          %s157 = scalar_lea.hbm %s0, %s156
          %s159 = sshll.u32 %s157, 4
          %s160 = int_to_ptr.hbm [resolvable:$true] %s159
          %s161 = sshll.u32 %s150, 4
          %s162 = int_to_ptr.vmem [resolvable:$true] %s161
          %164 = dma.hbm_to_vmem [thread:$0]  %s160, 512, %s162, %s147
        $region24: #{tpu_custom_call.1} parent=19 // pred_fallthru
          _
      $region20: #{tpu_custom_call.1} parent=5 // pred_fallthru
        _
      %p165 = scmp.le.s32.totalorder 1, %s15
      %p166 = scmp.lt.s32.totalorder %s15, 3
      %p167 = pnand %p165, %p166
      %p168 = pneg %p167
      // Predicated region
      $region25: #{tpu_custom_call.1} parent=5 // pred_check
        _
      $region26: #{tpu_custom_call.1} parent=5 // pred_check_branch
        %170 = sbr.rel (%p167) target = $region28
      $region27: #{tpu_custom_call.1} parent=5 // pred_region
        %s171 = ssub.s32 %s15, 1
        %s172 = sand.u32 %s42, 1
        %s173 = scalar_lea.sflag [#allocation3], %s172
        %s174 = sand.u32 %s42, 1
        %s175 = smul.addr %s174, 32
        %s176 = scalar_lea.vmem [#allocation2], %s175
        // Predicated region
        $region29: #{tpu_custom_call.1} parent=27 // pred_check
          %p177 = pneg %p55
        $region30: #{tpu_custom_call.1} parent=27 // pred_check_branch
          %179 = sbr.rel (%p177) target = $region32
        $region31: #{tpu_custom_call.1} parent=27 // pred_region
          %181 = dma.done %s173, 512
        $region32: #{tpu_custom_call.1} parent=27 // pred_fallthru
          _
        // Predicated region
        $region33: #{tpu_custom_call.1} parent=27 // pred_check
          %p182 = pneg %p81
        $region34: #{tpu_custom_call.1} parent=27 // pred_check_branch
          %184 = sbr.rel (%p182) target = $region36
        $region35: #{tpu_custom_call.1} parent=27 // pred_region
          %186 = dma.done [#allocation6], 512
        $region36: #{tpu_custom_call.1} parent=27 // pred_fallthru
          _
        %s187 = sand.u32 %s42, 1
        %s188 = scalar_lea.sflag [#allocation3], %s187
        %s189 = sand.u32 %s42, 1
        %s190 = smul.addr %s189, 32
        %s191 = scalar_lea.vmem [#allocation2], %s190
        %p192 = pneg %p55
        %p193 = pneg %p52
        %p194 = pneg %p81
        %p195 = pneg %p78
        %p196 = pneg %p109
        %p197 = pneg %p106
        %s198 = sand.u32 %s96, 1
        %s199 = scalar_lea.sflag [#allocation4], %s198
        %s200 = sand.u32 %s96, 1
        %s201 = smul.addr %s200, 32
        %s202 = scalar_lea.vmem [#allocation7], %s201
        %v203 = vld [vmem:[%s176] sm:$0xff]
        %v204 = vld [vmem:[%s176 + $0x8] sm:$0xff]
        %v205 = vld [vmem:[%s176 + $0x10] sm:$0xff]
        %v206 = vld [vmem:[%s176 + $0x18] sm:$0xff]
        %v207 = vld [vmem:[#allocation5] sm:$0xff]
        %v208 = vld [vmem:[#allocation5 + $0x8] sm:$0xff]
        %v209 = vld [vmem:[#allocation5 + $0x10] sm:$0xff]
        %v210 = vld [vmem:[#allocation5 + $0x18] sm:$0xff]
        %v211 = vadd.f32 %v203, %v207
        %v212 = vadd.f32 %v204, %v208
        %v213 = vadd.f32 %v205, %v209
        %v214 = vadd.f32 %v206, %v210
        %215 = vst [vmem:[%s202] sm:$0xff] %v211
        %216 = vst [vmem:[%s202 + $0x8] sm:$0xff] %v212
        %217 = vst [vmem:[%s202 + $0x10] sm:$0xff] %v213
        %218 = vst [vmem:[%s202 + $0x18] sm:$0xff] %v214
        %s219 = sand.u32 %s96, 1
        %s220 = scalar_lea.sflag [#allocation4], %s219
        %s221 = sand.u32 %s96, 1
        %s222 = smul.addr %s221, 32
        %s223 = scalar_lea.vmem [#allocation7], %s222
        // Predicated region
        $region37: #{tpu_custom_call.1} parent=27 // pred_check
          %p224 = pneg %p106
        $region38: #{tpu_custom_call.1} parent=27 // pred_check_branch
          %226 = sbr.rel (%p224) target = $region40
        $region39: #{tpu_custom_call.1} parent=27 // pred_region
          %228 = vsyncadd %s220, 0
          %s229 = smul.addr %s24, 4
          %s230 = smul.addr %s25, 4
          %s231 = sadd.s32 %s229, %s230
          %s232 = smul.addr %s231, 8
          %s233 = scalar_lea.hbm %s2, %s232
          %s235 = sshll.u32 %s223, 4
          %s236 = int_to_ptr.vmem [resolvable:$true] %s235
          %s237 = sshll.u32 %s233, 4
          %s238 = int_to_ptr.hbm [resolvable:$true] %s237
          %240 = dma.vmem_to_hbm [thread:$0]  %s236, 512, %s238, %s220
        $region40: #{tpu_custom_call.1} parent=27 // pred_fallthru
          _
      $region28: #{tpu_custom_call.1} parent=5 // pred_fallthru
        _
      %p241 = scmp.le.s32.totalorder 2, %s15
      // Predicated region
      $region41: #{tpu_custom_call.1} parent=5 // pred_check
        %p242 = pneg %p241
      $region42: #{tpu_custom_call.1} parent=5 // pred_check_branch
        %244 = sbr.rel (%p242) target = $region44
      $region43: #{tpu_custom_call.1} parent=5 // pred_region
        %s245 = ssub.s32 %s15, 2
        // Predicated region
        $region45: #{tpu_custom_call.1} parent=43 // pred_check
          %p246 = pneg %p112
        $region46: #{tpu_custom_call.1} parent=43 // pred_check_branch
          %248 = sbr.rel (%p246) target = $region48
        $region47: #{tpu_custom_call.1} parent=43 // pred_region
          %s249 = sand.u32 %s97, 1
          %s250 = scalar_lea.sflag [#allocation4], %s249
          %s251 = sand.u32 %s97, 1
          %s252 = smul.addr %s251, 32
          %s253 = scalar_lea.vmem [#allocation7], %s252
          %255 = dma.done %s250, 512
        $region48: #{tpu_custom_call.1} parent=43 // pred_fallthru
          _
      $region44: #{tpu_custom_call.1} parent=5 // pred_fallthru
        _
    $region6: #{tpu_custom_call.1} parent=1 // loop_footer
      %s19 = sadd.s32 1, %s15
    $region7: #{tpu_custom_call.1} parent=1 // loop_footer_branch
      %14 = sbr.rel target = $region3
    $region8: #{tpu_custom_call.1} parent=1 // loop_exit
      _
    %256 = vsyncpa [#allocation3], 1
    %s257 = scalar_lea.sflag [#allocation3], 1
    %258 = vsyncpa %s257, 1
    %259 = vsyncpa [#allocation6], 1
    %260 = vsyncpa [#allocation4], 1
    %s261 = scalar_lea.sflag [#allocation4], 1
    %262 = vsyncpa %s261, 1

</llo_original>
